<compile_context>
chip_gen: v7x
topology: tpu7x:2x2x1
jax: 0.10.0
libtpu: 0.0.40
codegen_flags: <defaults>
</compile_context>

<pallas_src>
import jax
import jax.numpy as jnp
from jax.experimental import pallas as pl
from jax.experimental.pallas import tpu as pltpu

_LANE = 128          # lane width: last dim of every block (lane-dense stores)
_ROW_ALIGN = 32      # sublane alignment valid for 32/16/8-bit dtypes
_MAX_TILE_ROWS = 1024  # 1024*128*4B = 512 KiB per f32 block per array


def _identity_copy_kernel(x_ref, o_ref):
    # One (tile_rows, 128) VMEM tile in -> same tile out.
    o_ref[...] = x_ref[...]


def _round_up(n, m):
    return ((n + m - 1) // m) * m


def identity_forward(x):
    """Pallas TPU implementation of nn.Identity().forward(x)."""
    orig_shape = x.shape
    n = x.size
    if n == 0:
        return x

    # Flatten to a lane-dense 2-D slab: (rows, 128), rows aligned for packing.
    flat = jnp.ravel(x)
    nrows = _round_up(pl.cdiv(n, _LANE), _ROW_ALIGN)
    tile_rows = min(_MAX_TILE_ROWS, nrows)
    nrows = _round_up(nrows, tile_rows)
    total = nrows * _LANE
    if total != n:
        flat = jnp.pad(flat, (0, total - n))
    x2d = flat.reshape(nrows, _LANE)

    grid = (nrows // tile_rows,)
    out2d = pl.pallas_call(
        _identity_copy_kernel,
        out_shape=jax.ShapeDtypeStruct((nrows, _LANE), x2d.dtype),
        grid_spec=pltpu.PrefetchScalarGridSpec(
            num_scalar_prefetch=0,
            grid=grid,
            in_specs=[pl.BlockSpec((tile_rows, _LANE), lambda i: (i, 0))],
            out_specs=pl.BlockSpec((tile_rows, _LANE), lambda i: (i, 0)),
        ),
        compiler_params=pltpu.CompilerParams(
            # Row tiles are independent: shard across TensorCores (v7x megacore).
            dimension_semantics=("parallel",),
            # Explicit scoped-VMEM limit: safe on v5e (16 MiB default) through
            # v7x (64 MiB physical); our working set is ~2 MiB anyway.
            vmem_limit_bytes=32 * 1024 * 1024,
        ),
    )(x2d)

    # Un-pad / restore the caller's shape (pure layout plumbing in the wrapper).
    return out2d.reshape(-1)[:n].reshape(orig_shape)


if __name__ == "__main__":
    key = jax.random.PRNGKey(0)
    k1, k2 = jax.random.split(key)

    # Small shapes consistent with the module: Identity accepts any tensor.
    x = jax.random.normal(k1, (2, 4, 16, 16), jnp.float32)  # B=2, C=4, H=W=16
    out = jax.block_until_ready(identity_forward(x))
    assert out.shape == x.shape and out.dtype == x.dtype
    assert jnp.array_equal(out, x), (
        f"max abs err {jnp.max(jnp.abs(out - x))}")

    # Ragged (non-128-multiple) size + bf16: exercises the padding path and
    # sub-32-bit sublane packing.
    y = jax.random.normal(k2, (3, 7, 5), jnp.float32).astype(jnp.bfloat16)
    out_y = jax.block_until_ready(identity_forward(y))
    assert out_y.shape == y.shape and out_y.dtype == y.dtype
    assert jnp.array_equal(out_y, y)

    print("KERNEL_OK")
</pallas_src>

<mosaic_0001>
module attributes {stable_mosaic.version = 11 : i64} {
  func.func @_identity_copy_kernel(%arg0: i32, %arg1: memref<32x128xf32, #tpu.memory_space<vmem>>, %arg2: memref<32x128xf32, #tpu.memory_space<vmem>>) attributes {dimension_semantics = [#tpu.dimension_semantics<parallel>], iteration_bounds = array<i64: 1>, scalar_prefetch = 0 : i64, scratch_operands = 0 : i64, tpu.core_type = #tpu.core_type<tc>, window_params = [{transform_indices = @transform_0, window_bounds = array<i64: 32, 128>}, {transform_indices = @transform_1, window_bounds = array<i64: 32, 128>}]} {
    %c0 = arith.constant 0 : index
    %c0_0 = arith.constant 0 : index
    %0 = vector.load %arg1[%c0, %c0_0] : memref<32x128xf32, #tpu.memory_space<vmem>>, vector<32x128xf32>
    %c0_1 = arith.constant 0 : index
    %c0_2 = arith.constant 0 : index
    %1 = vector.load %arg2[%c0_1, %c0_2] : memref<32x128xf32, #tpu.memory_space<vmem>>, vector<32x128xf32>
    tpu.vector_store %arg2[%c0_1, %c0_2], %0 {strides = array<i32>} : memref<32x128xf32, #tpu.memory_space<vmem>>, vector<32x128xf32>,
    return
  }
  func.func @transform_0(%arg0: i32) -> (i32, i32) {
    %c0_i32 = arith.constant 0 : i32
    %c0_i32_0 = arith.constant 0 : i32
    return %arg0, %c0_i32 : i32, i32
  }
  func.func @transform_1(%arg0: i32) -> (i32, i32) {
    %c0_i32 = arith.constant 0 : i32
    %c0_i32_0 = arith.constant 0 : i32
    return %arg0, %c0_i32 : i32, i32
  }
}

</mosaic_0001>

<llo_original>
// kernel: tpu_custom_call.1
$region0: #{tpu_custom_call.1}
  #allocation0 [shape = 'u32[]', space=smem, size = 0x4, offset = 0x4, fixed_abs, tag = 'smem constant byte address 0x4 - core index']
  #allocation1 [shape = 'u32[144,128]{1,0:T(1,128)}', space=vmem, size = 0x12000, scoped, tag = 'internal scratch']
  %s0 = inlined_call_operand.hbm [shape: f32[32,128], index: 0, kind: input, shape index: {}]
  %s1 = inlined_call_operand.hbm [shape: f32[32,128], index: 1, kind: output, shape index: {}]
  %s2 = sld [smem:[#allocation0]]
  $region18: #{tpu_custom_call.1} parent=0
    _
  %s4 = ssub.s32 1, %s2
  %s5 = scalar_select 0, %s4, %s2
  $region1: #{tpu_custom_call.1} parent=0
    #allocation2 [shape = 'u8[16384]{0}', space=vmem, size = 0x4000, scoped, tag = 'input window, operand 0, single buffered']
    #allocation3 [shape = 's32[1]{0}', space=sflag, size = 0x4, scoped, tag = 'scoped memory for tpu_custom_call.1']
    #allocation4 [shape = 's32[1]{0}', space=sflag, size = 0x4, scoped, tag = 'scoped memory for tpu_custom_call.1']
    #allocation5 [shape = 'u8[16384]{0}', space=vmem, size = 0x4000, scoped, tag = 'output window, operand 0, single buffered']
    %6 = vsyncpa [#allocation3], 0
    %7 = vsyncpa [#allocation4], 0
    // Predicated region
    $region2: #{tpu_custom_call.1} parent=1 // pred_check
      _
    $region3: #{tpu_custom_call.1} parent=1 // pred_check_branch
      %9 = sbr.rel (0) target = $region5
    $region4: #{tpu_custom_call.1} parent=1 // pred_region
      %s11 = ssub.s32 512, 512
      %12 = vsyncadd [#allocation3], %s11
      %s13 = sshll.u32 [#allocation2], 4
      %s14 = int_to_ptr.vmem [resolvable:$true] %s13
      %19 = dma.hbm_to_vmem [thread:$0]  %s0, 512, %s14, [#allocation3], 128, 128, 8
    $region5: #{tpu_custom_call.1} parent=1 // pred_fallthru
      _
    // Predicated region
    $region6: #{tpu_custom_call.1} parent=1 // pred_check
      _
    $region7: #{tpu_custom_call.1} parent=1 // pred_check_branch
      %21 = sbr.rel (0) target = $region9
    $region8: #{tpu_custom_call.1} parent=1 // pred_region
      %22 = dma.done [#allocation3], 512
    $region9: #{tpu_custom_call.1} parent=1 // pred_fallthru
      _
    %v23 = vld [vmem:[#allocation2] sm:$0xff]
    %v24 = vld [vmem:[#allocation2 + $0x8] sm:$0xff]
    %v25 = vld [vmem:[#allocation2 + $0x10] sm:$0xff]
    %v26 = vld [vmem:[#allocation2 + $0x18] sm:$0xff]
    %27 = vst [vmem:[#allocation5] sm:$0xff] %v23
    %28 = vst [vmem:[#allocation5 + $0x8] sm:$0xff] %v24
    %29 = vst [vmem:[#allocation5 + $0x10] sm:$0xff] %v25
    %30 = vst [vmem:[#allocation5 + $0x18] sm:$0xff] %v26
    // Predicated region
    $region10: #{tpu_custom_call.1} parent=1 // pred_check
      _
    $region11: #{tpu_custom_call.1} parent=1 // pred_check_branch
      %32 = sbr.rel (0) target = $region13
    $region12: #{tpu_custom_call.1} parent=1 // pred_region
      %s34 = ssub.s32 512, 512
      %35 = vsyncadd [#allocation4], %s34
      %s36 = sshll.u32 [#allocation5], 4
      %s37 = int_to_ptr.vmem [resolvable:$true] %s36
      %42 = dma.vmem_to_hbm [thread:$0]  %s37, 512, %s1, [#allocation4], 128, 128, 8
    $region13: #{tpu_custom_call.1} parent=1 // pred_fallthru
      _
    // Predicated region
    $region14: #{tpu_custom_call.1} parent=1 // pred_check
      _
    $region15: #{tpu_custom_call.1} parent=1 // pred_check_branch
      %44 = sbr.rel (0) target = $region17
    $region16: #{tpu_custom_call.1} parent=1 // pred_region
      %45 = dma.done [#allocation4], 512
    $region17: #{tpu_custom_call.1} parent=1 // pred_fallthru
      _
    %46 = vsyncpa [#allocation3], 1
    %47 = vsyncpa [#allocation4], 1

</llo_original>
